<compile_context>
chip_gen: v7x
topology: tpu7x:2x2x1
jax: 0.10.0
libtpu: 0.0.40
codegen_flags: <defaults>
</compile_context>

<pallas_src>
import functools
import math

import jax
import jax.numpy as jnp
from jax.experimental import pallas as pl
from jax.experimental.pallas import tpu as pltpu


def _wn_scale_mlp_kernel(out_dims, x_ref, ctx_ref, ctxw_ref, off_ref, *refs):
    """refs = [dirT_0, ..., dirT_L, out_ref]; out_dims[l] = out_features of layer l.

    ctxw_ref: (ctx_dim, 2*sum(out_dims)) = concat over layers of
              [ctx_scale * cscale_norm.T | Wb.T]
    off_ref:  (1, 2*sum(out_dims))       = concat over layers of [ones | bb]
    """
    out_ref = refs[-1]
    dir_refs = refs[:-1]
    n_layers = len(out_dims)

    ctx = ctx_ref[...]
    # One fused MXU matmul produces every layer's scale and bias term:
    #   columns [off : off+d]      -> scale_l = 1 + ctx_scale * ctx @ cscale_norm_l.T
    #   columns [off+d : off+2d]   -> bias_l  = ctx @ Wb_l.T + bb_l
    ctx_all = (jnp.dot(ctx, ctxw_ref[...], preferred_element_type=jnp.float32)
               + off_ref[...])

    h = x_ref[...]
    col = 0
    for li, d in enumerate(out_dims):
        scale = ctx_all[:, col:col + d]
        bias = ctx_all[:, col + d:col + 2 * d]
        col += 2 * d

        z = scale * jnp.dot(h, dir_refs[li][...],
                            preferred_element_type=jnp.float32) + bias
        if li < n_layers - 1:
            h = jnp.maximum(z, 0.0)        # 'relu' between hidden layers
        else:
            h = z                          # use_nonlinearity_output=False

    out_ref[...] = h.astype(out_ref.dtype)


def context_wn_scale_mlp(x, ctx, params, ctx_scale=0.1):
    """Fused ContextWNScaleMLP forward.

    x:      (B, input_dim)      float32
    ctx:    (B, context_dim)    float32
    params: list over layers (hidden layers + final fc) of tuples
            (direction (out, in), cscale (out, ctx), wb (out, ctx), bb (out,))
    """
    B = x.shape[0]
    out_dims = tuple(int(p[0].shape[0]) for p in params)
    out_dim = out_dims[-1]

    # ---- hoisted, activation-independent preprocessing (plain XLA ops) ----
    dirs_t = [p[0].T for p in params]                       # (in, out) per layer
    ctxw_cols, off_cols = [], []
    for (direction, cscale, wb, bb) in params:
        # TODO(synk): PyTorch module has no eps in the norm; we match it exactly.
        inv_norm = jax.lax.rsqrt(jnp.sum(cscale * cscale, axis=1, keepdims=True))
        cscale_n = cscale * inv_norm
        ctxw_cols.append(ctx_scale * cscale_n.T)            # (ctx, out)
        ctxw_cols.append(wb.T)                              # (ctx, out)
        off_cols.append(jnp.ones((1, direction.shape[0]), x.dtype))
        off_cols.append(bb.reshape(1, -1))
    ctxw = jnp.concatenate(ctxw_cols, axis=1)               # (ctx_dim, 2*total_out)
    offset = jnp.concatenate(off_cols, axis=1)              # (1,       2*total_out)

    # ---- batch tiling: one 'parallel' grid axis over row blocks ----
    batch_block = B if B <= 256 else 256
    grid = (pl.cdiv(B, batch_block),)

    in_specs = [
        pl.BlockSpec((batch_block, x.shape[1]), lambda i: (i, 0)),
        pl.BlockSpec((batch_block, ctx.shape[1]), lambda i: (i, 0)),
        pl.BlockSpec(ctxw.shape, lambda i: (0, 0)),      # grid-invariant, VMEM resident
        pl.BlockSpec(offset.shape, lambda i: (0, 0)),
    ] + [pl.BlockSpec(w.shape, lambda i: (0, 0)) for w in dirs_t]

    kernel = functools.partial(_wn_scale_mlp_kernel, out_dims)

    return pl.pallas_call(
        kernel,
        out_shape=jax.ShapeDtypeStruct((B, out_dim), x.dtype),
        grid_spec=pltpu.PrefetchScalarGridSpec(
            num_scalar_prefetch=0,
            grid=grid,
            in_specs=in_specs,
            out_specs=pl.BlockSpec((batch_block, out_dim), lambda i: (i, 0)),
        ),
        compiler_params=pltpu.CompilerParams(
            dimension_semantics=("parallel",)),
    )(x, ctx, ctxw, offset, *dirs_t)


def _ref_forward(x, ctx, params, ctx_scale=0.1):
    """Pure-JAX reference of ContextWNScaleMLP.forward (PyTorch semantics)."""
    h = x
    n = len(params)
    for li, (direction, cscale, wb, bb) in enumerate(params):
        bias = ctx @ wb.T + bb
        cscale_n = cscale / jnp.sqrt(jnp.sum(cscale * cscale, axis=1, keepdims=True))
        scale = 1.0 + ctx_scale * (ctx @ cscale_n.T)
        out = scale * (h @ direction.T) + bias
        h = jnp.maximum(out, 0.0) if li < n - 1 else out
    return h


def _init_layer(key, in_features, out_features, ctx_features):
    """Deterministic init mirroring ContextWeightNormalizedLinear.reset_parameters."""
    k1, k2, k3, k4 = jax.random.split(key, 4)
    bound_in = 1.0 / math.sqrt(in_features)
    bound_ctx = 1.0 / math.sqrt(ctx_features)
    direction = jax.random.uniform(k1, (out_features, in_features), jnp.float32,
                                   -bound_in, bound_in)
    cscale = 0.005 * jax.random.normal(k2, (out_features, ctx_features), jnp.float32)
    wb = jax.random.uniform(k3, (out_features, ctx_features), jnp.float32,
                            -bound_ctx, bound_ctx)
    bb = jax.random.uniform(k4, (out_features,), jnp.float32, -bound_ctx, bound_ctx)
    return direction, cscale, wb, bb


if __name__ == "__main__":
    # Module config (small shapes, consistent with ContextWNScaleMLP).
    batch = 8
    input_dim = 4
    context_dim = 4
    hidden_dim = 32
    output_dim = 4
    num_hidden_layers = 3

    key = jax.random.PRNGKey(0)
    kx, kc, kp = jax.random.split(key, 3)

    x = jax.random.normal(kx, (batch, input_dim), jnp.float32)
    ctx = jax.random.normal(kc, (batch, context_dim), jnp.float32)

    layer_keys = jax.random.split(kp, num_hidden_layers + 1)
    params = []
    for i in range(num_hidden_layers):
        in1 = input_dim if i == 0 else hidden_dim
        params.append(_init_layer(layer_keys[i], in1, hidden_dim, context_dim))
    fc_in = input_dim if num_hidden_layers == 0 else hidden_dim
    params.append(_init_layer(layer_keys[-1], fc_in, output_dim, context_dim))

    out = context_wn_scale_mlp(x, ctx, params)
    out = jax.block_until_ready(out)

    ref = _ref_forward(x, ctx, params)
    assert out.shape == (batch, output_dim)
    assert jnp.allclose(out, ref, rtol=1e-4, atol=1e-5), "mismatch vs reference"

    print("KERNEL_OK")
</pallas_src>

<mosaic_0001>
module attributes {stable_mosaic.version = 11 : i64} {
  func.func @_wn_scale_mlp_kernel(%arg0: i32, %arg1: memref<8x4xf32, #tpu.memory_space<vmem>>, %arg2: memref<8x4xf32, #tpu.memory_space<vmem>>, %arg3: memref<4x200xf32, #tpu.memory_space<vmem>>, %arg4: memref<1x200xf32, #tpu.memory_space<vmem>>, %arg5: memref<4x32xf32, #tpu.memory_space<vmem>>, %arg6: memref<32x32xf32, #tpu.memory_space<vmem>>, %arg7: memref<32x32xf32, #tpu.memory_space<vmem>>, %arg8: memref<32x4xf32, #tpu.memory_space<vmem>>, %arg9: memref<8x4xf32, #tpu.memory_space<vmem>>) attributes {dimension_semantics = [#tpu.dimension_semantics<parallel>], iteration_bounds = array<i64: 1>, scalar_prefetch = 0 : i64, scratch_operands = 0 : i64, tpu.core_type = #tpu.core_type<tc>, window_params = [{transform_indices = @transform_0, window_bounds = array<i64: 8, 4>}, {transform_indices = @transform_1, window_bounds = array<i64: 8, 4>}, {pipeline_mode = #tpu.pipeline_mode<synchronous>, transform_indices = @transform_2, window_bounds = array<i64: 4, 200>}, {pipeline_mode = #tpu.pipeline_mode<synchronous>, transform_indices = @transform_3, window_bounds = array<i64: 1, 200>}, {pipeline_mode = #tpu.pipeline_mode<synchronous>, transform_indices = @transform_4, window_bounds = array<i64: 4, 32>}, {pipeline_mode = #tpu.pipeline_mode<synchronous>, transform_indices = @transform_5, window_bounds = array<i64: 32, 32>}, {pipeline_mode = #tpu.pipeline_mode<synchronous>, transform_indices = @transform_6, window_bounds = array<i64: 32, 32>}, {pipeline_mode = #tpu.pipeline_mode<synchronous>, transform_indices = @transform_7, window_bounds = array<i64: 32, 4>}, {transform_indices = @transform_8, window_bounds = array<i64: 8, 4>}]} {
    %c0 = arith.constant 0 : index
    %c0_0 = arith.constant 0 : index
    %0 = vector.load %arg2[%c0, %c0_0] : memref<8x4xf32, #tpu.memory_space<vmem>>, vector<8x4xf32>
    %c0_1 = arith.constant 0 : index
    %c0_2 = arith.constant 0 : index
    %1 = vector.load %arg3[%c0_1, %c0_2] : memref<4x200xf32, #tpu.memory_space<vmem>>, vector<4x200xf32>
    %cst = arith.constant dense<0.000000e+00> : vector<8x200xf32>
    %2 = tpu.matmul %0, %1, %cst {dimension_numbers = #tpu.dot_dimension_numbers<[1], [0], [0], [1], [0, 0, 1, 1], [], []>} : vector<8x4xf32>, vector<4x200xf32>, vector<8x200xf32> -> vector<8x200xf32>
    %c0_3 = arith.constant 0 : index
    %c0_4 = arith.constant 0 : index
    %3 = vector.load %arg4[%c0_3, %c0_4] : memref<1x200xf32, #tpu.memory_space<vmem>>, vector<1x200xf32>
    %4 = vector.broadcast %3 : vector<1x200xf32> to vector<8x200xf32>
    %5 = arith.addf %2, %4 : vector<8x200xf32>
    %c0_5 = arith.constant 0 : index
    %c0_6 = arith.constant 0 : index
    %6 = vector.load %arg1[%c0_5, %c0_6] : memref<8x4xf32, #tpu.memory_space<vmem>>, vector<8x4xf32>
    %7 = vector.extract_strided_slice %5 {offsets = [0, 0], sizes = [8, 32], strides = [1, 1]} : vector<8x200xf32> to vector<8x32xf32>
    %8 = vector.extract_strided_slice %5 {offsets = [0, 32], sizes = [8, 32], strides = [1, 1]} : vector<8x200xf32> to vector<8x32xf32>
    %c0_7 = arith.constant 0 : index
    %c0_8 = arith.constant 0 : index
    %9 = vector.load %arg5[%c0_7, %c0_8] : memref<4x32xf32, #tpu.memory_space<vmem>>, vector<4x32xf32>
    %cst_9 = arith.constant dense<0.000000e+00> : vector<8x32xf32>
    %10 = tpu.matmul %6, %9, %cst_9 {dimension_numbers = #tpu.dot_dimension_numbers<[1], [0], [0], [1], [0, 0, 1, 1], [], []>} : vector<8x4xf32>, vector<4x32xf32>, vector<8x32xf32> -> vector<8x32xf32>
    %11 = arith.mulf %7, %10 : vector<8x32xf32>
    %12 = arith.addf %11, %8 : vector<8x32xf32>
    %cst_10 = arith.constant 0.000000e+00 : f32
    %13 = vector.broadcast %cst_10 : f32 to vector<8x32xf32>
    %14 = arith.maximumf %12, %13 : vector<8x32xf32>
    %15 = vector.extract_strided_slice %5 {offsets = [0, 64], sizes = [8, 32], strides = [1, 1]} : vector<8x200xf32> to vector<8x32xf32>
    %16 = vector.extract_strided_slice %5 {offsets = [0, 96], sizes = [8, 32], strides = [1, 1]} : vector<8x200xf32> to vector<8x32xf32>
    %c0_11 = arith.constant 0 : index
    %c0_12 = arith.constant 0 : index
    %17 = vector.load %arg6[%c0_11, %c0_12] : memref<32x32xf32, #tpu.memory_space<vmem>>, vector<32x32xf32>
    %cst_13 = arith.constant dense<0.000000e+00> : vector<8x32xf32>
    %18 = tpu.matmul %14, %17, %cst_13 {dimension_numbers = #tpu.dot_dimension_numbers<[1], [0], [0], [1], [0, 0, 1, 1], [], []>} : vector<8x32xf32>, vector<32x32xf32>, vector<8x32xf32> -> vector<8x32xf32>
    %19 = arith.mulf %15, %18 : vector<8x32xf32>
    %20 = arith.addf %19, %16 : vector<8x32xf32>
    %cst_14 = arith.constant 0.000000e+00 : f32
    %21 = vector.broadcast %cst_14 : f32 to vector<8x32xf32>
    %22 = arith.maximumf %20, %21 : vector<8x32xf32>
    %23 = vector.extract_strided_slice %5 {offsets = [0, 128], sizes = [8, 32], strides = [1, 1]} : vector<8x200xf32> to vector<8x32xf32>
    %24 = vector.extract_strided_slice %5 {offsets = [0, 160], sizes = [8, 32], strides = [1, 1]} : vector<8x200xf32> to vector<8x32xf32>
    %c0_15 = arith.constant 0 : index
    %c0_16 = arith.constant 0 : index
    %25 = vector.load %arg7[%c0_15, %c0_16] : memref<32x32xf32, #tpu.memory_space<vmem>>, vector<32x32xf32>
    %cst_17 = arith.constant dense<0.000000e+00> : vector<8x32xf32>
    %26 = tpu.matmul %22, %25, %cst_17 {dimension_numbers = #tpu.dot_dimension_numbers<[1], [0], [0], [1], [0, 0, 1, 1], [], []>} : vector<8x32xf32>, vector<32x32xf32>, vector<8x32xf32> -> vector<8x32xf32>
    %27 = arith.mulf %23, %26 : vector<8x32xf32>
    %28 = arith.addf %27, %24 : vector<8x32xf32>
    %cst_18 = arith.constant 0.000000e+00 : f32
    %29 = vector.broadcast %cst_18 : f32 to vector<8x32xf32>
    %30 = arith.maximumf %28, %29 : vector<8x32xf32>
    %31 = vector.extract_strided_slice %5 {offsets = [0, 192], sizes = [8, 4], strides = [1, 1]} : vector<8x200xf32> to vector<8x4xf32>
    %32 = vector.extract_strided_slice %5 {offsets = [0, 196], sizes = [8, 4], strides = [1, 1]} : vector<8x200xf32> to vector<8x4xf32>
    %c0_19 = arith.constant 0 : index
    %c0_20 = arith.constant 0 : index
    %33 = vector.load %arg8[%c0_19, %c0_20] : memref<32x4xf32, #tpu.memory_space<vmem>>, vector<32x4xf32>
    %cst_21 = arith.constant dense<0.000000e+00> : vector<8x4xf32>
    %34 = tpu.matmul %30, %33, %cst_21 {dimension_numbers = #tpu.dot_dimension_numbers<[1], [0], [0], [1], [0, 0, 1, 1], [], []>} : vector<8x32xf32>, vector<32x4xf32>, vector<8x4xf32> -> vector<8x4xf32>
    %35 = arith.mulf %31, %34 : vector<8x4xf32>
    %36 = arith.addf %35, %32 : vector<8x4xf32>
    %c0_22 = arith.constant 0 : index
    %c0_23 = arith.constant 0 : index
    %37 = vector.load %arg9[%c0_22, %c0_23] : memref<8x4xf32, #tpu.memory_space<vmem>>, vector<8x4xf32>
    tpu.vector_store %arg9[%c0_22, %c0_23], %36 {strides = array<i32>} : memref<8x4xf32, #tpu.memory_space<vmem>>, vector<8x4xf32>,
    return
  }
  func.func @transform_0(%arg0: i32) -> (i32, i32) {
    %c0_i32 = arith.constant 0 : i32
    %c0_i32_0 = arith.constant 0 : i32
    return %arg0, %c0_i32 : i32, i32
  }
  func.func @transform_1(%arg0: i32) -> (i32, i32) {
    %c0_i32 = arith.constant 0 : i32
    %c0_i32_0 = arith.constant 0 : i32
    return %arg0, %c0_i32 : i32, i32
  }
  func.func @transform_2(%arg0: i32) -> (i32, i32) {
    %c0_i32 = arith.constant 0 : i32
    %c0_i32_0 = arith.constant 0 : i32
    %c0_i32_1 = arith.constant 0 : i32
    return %c0_i32, %c0_i32_0 : i32, i32
  }
  func.func @transform_3(%arg0: i32) -> (i32, i32) {
    %c0_i32 = arith.constant 0 : i32
    %c0_i32_0 = arith.constant 0 : i32
    %c0_i32_1 = arith.constant 0 : i32
    return %c0_i32, %c0_i32_0 : i32, i32
  }
  func.func @transform_4(%arg0: i32) -> (i32, i32) {
    %c0_i32 = arith.constant 0 : i32
    %c0_i32_0 = arith.constant 0 : i32
    %c0_i32_1 = arith.constant 0 : i32
    return %c0_i32, %c0_i32_0 : i32, i32
  }
  func.func @transform_5(%arg0: i32) -> (i32, i32) {
    %c0_i32 = arith.constant 0 : i32
    %c0_i32_0 = arith.constant 0 : i32
    %c0_i32_1 = arith.constant 0 : i32
    return %c0_i32, %c0_i32_0 : i32, i32
  }
  func.func @transform_6(%arg0: i32) -> (i32, i32) {
    %c0_i32 = arith.constant 0 : i32
    %c0_i32_0 = arith.constant 0 : i32
    %c0_i32_1 = arith.constant 0 : i32
    return %c0_i32, %c0_i32_0 : i32, i32
  }
  func.func @transform_7(%arg0: i32) -> (i32, i32) {
    %c0_i32 = arith.constant 0 : i32
    %c0_i32_0 = arith.constant 0 : i32
    %c0_i32_1 = arith.constant 0 : i32
    return %c0_i32, %c0_i32_0 : i32, i32
  }
  func.func @transform_8(%arg0: i32) -> (i32, i32) {
    %c0_i32 = arith.constant 0 : i32
    %c0_i32_0 = arith.constant 0 : i32
    return %arg0, %c0_i32 : i32, i32
  }
}

</mosaic_0001>

<llo_original>
// kernel: tpu_custom_call.1
$region0: #{tpu_custom_call.1}
  #allocation0 [shape = 'u32[]', space=smem, size = 0x4, offset = 0x4, fixed_abs, tag = 'smem constant byte address 0x4 - core index']
  #allocation1 [shape = 'u32[144,128]{1,0:T(1,128)}', space=vmem, size = 0x12000, scoped, tag = 'internal scratch']
  %s0 = inlined_call_operand.vmem [shape: f32[8,4], index: 0, kind: input, shape index: {}]
  %s1 = inlined_call_operand.vmem [shape: f32[8,4], index: 1, kind: input, shape index: {}]
  %s2 = inlined_call_operand.hbm [shape: f32[4,200], index: 2, kind: input, shape index: {}]
  %s3 = inlined_call_operand.vmem [shape: f32[1,200], index: 3, kind: input, shape index: {}]
  %s4 = inlined_call_operand.vmem [shape: f32[4,32], index: 4, kind: input, shape index: {}]
  %s5 = inlined_call_operand.vmem [shape: f32[32,32], index: 5, kind: input, shape index: {}]
  %s6 = inlined_call_operand.vmem [shape: f32[32,32], index: 6, kind: input, shape index: {}]
  %s7 = inlined_call_operand.vmem [shape: f32[32,4], index: 7, kind: input, shape index: {}]
  %s8 = inlined_call_operand.vmem [shape: f32[8,4], index: 8, kind: output, shape index: {}]
  %s9 = sld [smem:[#allocation0]]
  $region46: #{tpu_custom_call.1} parent=0
    _
  %s11 = ssub.s32 1, %s9
  %s12 = scalar_select 0, %s11, %s9
  $region1: #{tpu_custom_call.1} parent=0
    #allocation2 [shape = 'u8[4096]{0}', space=vmem, size = 0x1000, scoped, tag = 'input window, operand 2, single buffered']
    #allocation3 [shape = 's32[1]{0}', space=sflag, size = 0x4, scoped, tag = 'scoped memory for tpu_custom_call.1']
    %13 = vsyncpa [#allocation3], 0
    // Predicated region
    $region2: #{tpu_custom_call.1} parent=1 // pred_check
      _
    $region3: #{tpu_custom_call.1} parent=1 // pred_check_branch
      %15 = sbr.rel (0) target = $region5
    $region4: #{tpu_custom_call.1} parent=1 // pred_region
      _
    $region5: #{tpu_custom_call.1} parent=1 // pred_fallthru
      _
    // Predicated region
    $region6: #{tpu_custom_call.1} parent=1 // pred_check
      _
    $region7: #{tpu_custom_call.1} parent=1 // pred_check_branch
      %17 = sbr.rel (0) target = $region9
    $region8: #{tpu_custom_call.1} parent=1 // pred_region
      _
    $region9: #{tpu_custom_call.1} parent=1 // pred_fallthru
      _
    // Predicated region
    $region10: #{tpu_custom_call.1} parent=1 // pred_check
      _
    $region11: #{tpu_custom_call.1} parent=1 // pred_check_branch
      %19 = sbr.rel (0) target = $region13
    $region12: #{tpu_custom_call.1} parent=1 // pred_region
      %s21 = ssub.s32 128, 128
      %22 = vsyncadd [#allocation3], %s21
      %s24 = sshll.u32 [#allocation2], 4
      %s25 = int_to_ptr.vmem [resolvable:$true] %s24
      %27 = dma.hbm_to_vmem [thread:$0]  %s2, 128, %s25, [#allocation3]
    $region13: #{tpu_custom_call.1} parent=1 // pred_fallthru
      _
    // Predicated region
    $region14: #{tpu_custom_call.1} parent=1 // pred_check
      _
    $region15: #{tpu_custom_call.1} parent=1 // pred_check_branch
      %29 = sbr.rel (0) target = $region17
    $region16: #{tpu_custom_call.1} parent=1 // pred_region
      _
    $region17: #{tpu_custom_call.1} parent=1 // pred_fallthru
      _
    // Predicated region
    $region18: #{tpu_custom_call.1} parent=1 // pred_check
      _
    $region19: #{tpu_custom_call.1} parent=1 // pred_check_branch
      %31 = sbr.rel (0) target = $region21
    $region20: #{tpu_custom_call.1} parent=1 // pred_region
      _
    $region21: #{tpu_custom_call.1} parent=1 // pred_fallthru
      _
    // Predicated region
    $region22: #{tpu_custom_call.1} parent=1 // pred_check
      _
    $region23: #{tpu_custom_call.1} parent=1 // pred_check_branch
      %33 = sbr.rel (0) target = $region25
    $region24: #{tpu_custom_call.1} parent=1 // pred_region
      _
    $region25: #{tpu_custom_call.1} parent=1 // pred_fallthru
      _
    // Predicated region
    $region26: #{tpu_custom_call.1} parent=1 // pred_check
      _
    $region27: #{tpu_custom_call.1} parent=1 // pred_check_branch
      %35 = sbr.rel (0) target = $region29
    $region28: #{tpu_custom_call.1} parent=1 // pred_region
      _
    $region29: #{tpu_custom_call.1} parent=1 // pred_fallthru
      _
    // Predicated region
    $region30: #{tpu_custom_call.1} parent=1 // pred_check
      _
    $region31: #{tpu_custom_call.1} parent=1 // pred_check_branch
      %37 = sbr.rel (0) target = $region33
    $region32: #{tpu_custom_call.1} parent=1 // pred_region
      _
    $region33: #{tpu_custom_call.1} parent=1 // pred_fallthru
      _
    // Predicated region
    $region34: #{tpu_custom_call.1} parent=1 // pred_check
      _
    $region35: #{tpu_custom_call.1} parent=1 // pred_check_branch
      %39 = sbr.rel (0) target = $region37
    $region36: #{tpu_custom_call.1} parent=1 // pred_region
      %40 = dma.done [#allocation3], 128
    $region37: #{tpu_custom_call.1} parent=1 // pred_fallthru
      _
    %v41 = vld [vmem:[%s1] sm:$0xff]
    %v42 = vld [vmem:[#allocation2] sm:$0xff]
    %v43 = vld [vmem:[%s3] sm:$0x3]
    %v45 = vlaneseq
    %v46 = vshrl.u32 %v45, 7
    %v47 = vsub.s32 0, %v46
    %v48 = vrot.slane %v43, %v47
    %v49 = vlaneseq
    %v50 = vshrl.u32 %v49, 7
    %v51 = vsub.s32 1, %v50
    %v52 = vrot.slane %v43, %v51
    %v56 = vcombine.high %v42, %v42
    %vm57 = vcmask 31744
    %v59 = vsel %vm57, %v41, 0
    %vm61 = vcmask 1043456
    %v62 = vsel %vm61, %v42, 0
    %v64 = vsel %vm61, %v56, 0
    %66 = vmatprep.subr.mxu0 %v64
    %67 = vmatpush1.msra.mxu0 %v62
    %68 = vmatprep.subr.mxu0 0.0
    %69 = vmatpush1.msra.mxu0 0.0
    %70 = vmatprep.subr.mxu0 0.0
    %71 = vmatpush1.msra.mxu0 0.0
    %72 = vmatprep.subr.mxu0 0.0
    %73 = vmatpush1.msra.mxu0 0.0
    %74 = vmatprep.subr.mxu0 0.0
    %75 = vmatpush1.msra.mxu0 0.0
    %76 = vmatprep.subr.mxu0 0.0
    %77 = vmatpush1.msra.mxu0 0.0
    %78 = vmatprep.subr.mxu0 0.0
    %79 = vmatpush1.msra.mxu0 0.0
    %80 = vmatprep.subr.mxu0 0.0
    %81 = vmatpush1.msra.mxu0 0.0
    %82 = vmatprep.subr.mxu0 0.0
    %83 = vmatpush1.msra.mxu0 0.0
    %84 = vmatprep.subr.mxu0 0.0
    %85 = vmatpush1.msra.mxu0 0.0
    %86 = vmatprep.subr.mxu0 0.0
    %87 = vmatpush1.msra.mxu0 0.0
    %88 = vmatprep.subr.mxu0 0.0
    %89 = vmatpush1.msra.mxu0 0.0
    %90 = vmatprep.subr.mxu0 0.0
    %91 = vmatpush1.msra.mxu0 0.0
    %92 = vmatprep.subr.mxu0 0.0
    %93 = vmatpush1.msra.mxu0 0.0
    %94 = vmatprep.subr.mxu0 0.0
    %95 = vmatpush1.msra.mxu0 0.0
    %96 = vmatprep.subr.mxu0 0.0
    %97 = vmatpush1.msra.mxu0 0.0
    %98 = vmatprep.subr.mxu0 0.0
    %99 = vmatpush1.msra.mxu0 0.0
    %100 = vmatprep.subr.mxu0 0.0
    %101 = vmatpush1.msra.mxu0 0.0
    %102 = vmatprep.subr.mxu0 0.0
    %103 = vmatpush1.msra.mxu0 0.0
    %104 = vmatprep.subr.mxu0 0.0
    %105 = vmatpush1.msra.mxu0 0.0
    %106 = vmatprep.subr.mxu0 0.0
    %107 = vmatpush1.msra.mxu0 0.0
    %108 = vmatprep.subr.mxu0 0.0
    %109 = vmatpush1.msra.mxu0 0.0
    %110 = vmatprep.subr.mxu0 0.0
    %111 = vmatpush1.msra.mxu0 0.0
    %112 = vmatprep.subr.mxu0 0.0
    %113 = vmatpush1.msra.mxu0 0.0
    %114 = vmatprep.subr.mxu0 0.0
    %115 = vmatpush1.msra.mxu0 0.0
    %116 = vmatprep.subr.mxu0 0.0
    %117 = vmatpush1.msra.mxu0 0.0
    %118 = vmatprep.subr.mxu0 0.0
    %119 = vmatpush1.msra.mxu0 0.0
    %120 = vmatprep.subr.mxu0 0.0
    %121 = vmatpush1.msra.mxu0 0.0
    %122 = vmatprep.subr.mxu0 0.0
    %123 = vmatpush1.msra.mxu0 0.0
    %124 = vmatprep.subr.mxu0 0.0
    %125 = vmatpush1.msra.mxu0 0.0
    %126 = vmatprep.subr.mxu0 0.0
    %127 = vmatpush1.msra.mxu0 0.0
    %128 = vmatprep.subr.mxu0 0.0
    %129 = vmatpush1.msra.mxu0 0.0
    %130 = vmatprep.mubr.f32.mxu0 0.0
    %131 = vmatmul.mubr.f32.gmra.mrb[0].mxu0 %v59
    %v132 = vpop.f32.mrb[0].mxu0
    %v133 = vadd.f32 %v48, %v132
    %v134 = vpop.f32.mrb[0].mxu0
    %v135 = vadd.f32 %v52, %v134
    %136 = vdwg.mxu0
    %v137 = vld [vmem:[%s0] sm:$0xff]
    %v138 = vld [vmem:[%s4] sm:$0xf]
    %v140 = vsel %vm57, %v137, 0
    %v143 = vsel %vm61, %v138, 0
    %145 = vmatprep.subr.mxu0 0.0
    %146 = vmatpush1.msra.mxu0 %v143
    %147 = vmatprep.subr.mxu0 0.0
    %148 = vmatpush1.msra.mxu0 0.0
    %149 = vmatprep.subr.mxu0 0.0
    %150 = vmatpush1.msra.mxu0 0.0
    %151 = vmatprep.subr.mxu0 0.0
    %152 = vmatpush1.msra.mxu0 0.0
    %153 = vmatprep.subr.mxu0 0.0
    %154 = vmatpush1.msra.mxu0 0.0
    %155 = vmatprep.subr.mxu0 0.0
    %156 = vmatpush1.msra.mxu0 0.0
    %157 = vmatprep.subr.mxu0 0.0
    %158 = vmatpush1.msra.mxu0 0.0
    %159 = vmatprep.subr.mxu0 0.0
    %160 = vmatpush1.msra.mxu0 0.0
    %161 = vmatprep.subr.mxu0 0.0
    %162 = vmatpush1.msra.mxu0 0.0
    %163 = vmatprep.subr.mxu0 0.0
    %164 = vmatpush1.msra.mxu0 0.0
    %165 = vmatprep.subr.mxu0 0.0
    %166 = vmatpush1.msra.mxu0 0.0
    %167 = vmatprep.subr.mxu0 0.0
    %168 = vmatpush1.msra.mxu0 0.0
    %169 = vmatprep.subr.mxu0 0.0
    %170 = vmatpush1.msra.mxu0 0.0
    %171 = vmatprep.subr.mxu0 0.0
    %172 = vmatpush1.msra.mxu0 0.0
    %173 = vmatprep.subr.mxu0 0.0
    %174 = vmatpush1.msra.mxu0 0.0
    %175 = vmatprep.subr.mxu0 0.0
    %176 = vmatpush1.msra.mxu0 0.0
    %177 = vmatprep.subr.mxu0 0.0
    %178 = vmatpush1.msra.mxu0 0.0
    %179 = vmatprep.subr.mxu0 0.0
    %180 = vmatpush1.msra.mxu0 0.0
    %181 = vmatprep.subr.mxu0 0.0
    %182 = vmatpush1.msra.mxu0 0.0
    %183 = vmatprep.subr.mxu0 0.0
    %184 = vmatpush1.msra.mxu0 0.0
    %185 = vmatprep.subr.mxu0 0.0
    %186 = vmatpush1.msra.mxu0 0.0
    %187 = vmatprep.subr.mxu0 0.0
    %188 = vmatpush1.msra.mxu0 0.0
    %189 = vmatprep.subr.mxu0 0.0
    %190 = vmatpush1.msra.mxu0 0.0
    %191 = vmatprep.subr.mxu0 0.0
    %192 = vmatpush1.msra.mxu0 0.0
    %193 = vmatprep.subr.mxu0 0.0
    %194 = vmatpush1.msra.mxu0 0.0
    %195 = vmatprep.subr.mxu0 0.0
    %196 = vmatpush1.msra.mxu0 0.0
    %197 = vmatprep.subr.mxu0 0.0
    %198 = vmatpush1.msra.mxu0 0.0
    %199 = vmatprep.subr.mxu0 0.0
    %200 = vmatpush1.msra.mxu0 0.0
    %201 = vmatprep.subr.mxu0 0.0
    %202 = vmatpush1.msra.mxu0 0.0
    %203 = vmatprep.subr.mxu0 0.0
    %204 = vmatpush1.msra.mxu0 0.0
    %205 = vmatprep.subr.mxu0 0.0
    %206 = vmatpush1.msra.mxu0 0.0
    %207 = vmatprep.subr.mxu0 0.0
    %208 = vmatpush1.msra.mxu0 0.0
    %209 = vmatprep.mubr.f32.mxu0 0.0
    %210 = vmatmul.mubr.f32.gmra.mrb[0].mxu0 %v140
    %v211 = vpop.f32.mrb[0].mxu0
    %v212 = vadd.f32 0.0, %v211
    %v213 = vpop.f32.mrb[0].mxu0
    %214 = vdwg.mxu0
    %v215 = vmul.f32 %v133, %v212
    %217 = vrot.lane.b32.xlu0 %v133, 96
    %v218 = vpop.permute.xlu0 %217
    %v220 = vadd.f32 %v215, %v218
    %v221 = vmax.f32 %v220, 0.0
    %v222 = vld [vmem:[%s5] sm:$0xff]
    %v223 = vld [vmem:[%s5 + $0x8] sm:$0xff]
    %v224 = vld [vmem:[%s5 + $0x10] sm:$0xff]
    %v225 = vld [vmem:[%s5 + $0x18] sm:$0xff]
    %vm226 = vcmask 261120
    %v228 = vsel %vm226, %v221, 0
    %230 = vmatprep.subr.mxu0 0.0
    %231 = vmatpush1.msra.mxu0 %v222
    %232 = vmatprep.subr.mxu0 0.0
    %233 = vmatpush1.msra.mxu0 %v223
    %234 = vmatprep.subr.mxu0 0.0
    %235 = vmatpush1.msra.mxu0 %v224
    %236 = vmatprep.subr.mxu0 0.0
    %237 = vmatpush1.msra.mxu0 %v225
    %238 = vmatprep.subr.mxu0 0.0
    %239 = vmatpush1.msra.mxu0 0.0
    %240 = vmatprep.subr.mxu0 0.0
    %241 = vmatpush1.msra.mxu0 0.0
    %242 = vmatprep.subr.mxu0 0.0
    %243 = vmatpush1.msra.mxu0 0.0
    %244 = vmatprep.subr.mxu0 0.0
    %245 = vmatpush1.msra.mxu0 0.0
    %246 = vmatprep.subr.mxu0 0.0
    %247 = vmatpush1.msra.mxu0 0.0
    %248 = vmatprep.subr.mxu0 0.0
    %249 = vmatpush1.msra.mxu0 0.0
    %250 = vmatprep.subr.mxu0 0.0
    %251 = vmatpush1.msra.mxu0 0.0
    %252 = vmatprep.subr.mxu0 0.0
    %253 = vmatpush1.msra.mxu0 0.0
    %254 = vmatprep.subr.mxu0 0.0
    %255 = vmatpush1.msra.mxu0 0.0
    %256 = vmatprep.subr.mxu0 0.0
    %257 = vmatpush1.msra.mxu0 0.0
    %258 = vmatprep.subr.mxu0 0.0
    %259 = vmatpush1.msra.mxu0 0.0
    %260 = vmatprep.subr.mxu0 0.0
    %261 = vmatpush1.msra.mxu0 0.0
    %262 = vmatprep.subr.mxu0 0.0
    %263 = vmatpush1.msra.mxu0 0.0
    %264 = vmatprep.subr.mxu0 0.0
    %265 = vmatpush1.msra.mxu0 0.0
    %266 = vmatprep.subr.mxu0 0.0
    %267 = vmatpush1.msra.mxu0 0.0
    %268 = vmatprep.subr.mxu0 0.0
    %269 = vmatpush1.msra.mxu0 0.0
    %270 = vmatprep.subr.mxu0 0.0
    %271 = vmatpush1.msra.mxu0 0.0
    %272 = vmatprep.subr.mxu0 0.0
    %273 = vmatpush1.msra.mxu0 0.0
    %274 = vmatprep.subr.mxu0 0.0
    %275 = vmatpush1.msra.mxu0 0.0
    %276 = vmatprep.subr.mxu0 0.0
    %277 = vmatpush1.msra.mxu0 0.0
    %278 = vmatprep.subr.mxu0 0.0
    %279 = vmatpush1.msra.mxu0 0.0
    %280 = vmatprep.subr.mxu0 0.0
    %281 = vmatpush1.msra.mxu0 0.0
    %282 = vmatprep.subr.mxu0 0.0
    %283 = vmatpush1.msra.mxu0 0.0
    %284 = vmatprep.subr.mxu0 0.0
    %285 = vmatpush1.msra.mxu0 0.0
    %286 = vmatprep.subr.mxu0 0.0
    %287 = vmatpush1.msra.mxu0 0.0
    %288 = vmatprep.subr.mxu0 0.0
    %289 = vmatpush1.msra.mxu0 0.0
    %290 = vmatprep.subr.mxu0 0.0
    %291 = vmatpush1.msra.mxu0 0.0
    %292 = vmatprep.subr.mxu0 0.0
    %293 = vmatpush1.msra.mxu0 0.0
    %294 = vmatprep.mubr.f32.mxu0 0.0
    %295 = vmatmul.mubr.f32.gmra.mrb[0].mxu0 %v228
    %v296 = vpop.f32.mrb[0].mxu0
    %v297 = vadd.f32 0.0, %v296
    %v298 = vpop.f32.mrb[0].mxu0
    %299 = vdwg.mxu0
    %301 = vrot.lane.b32.xlu0 %v297, 64
    %v302 = vpop.permute.xlu0 %301
    %v304 = vmul.f32 %v133, %v302
    %v305 = vadd.f32 %v304, %v218
    %v306 = vmax.f32 %v305, 0.0
    %v307 = vld [vmem:[%s6] sm:$0xff]
    %v308 = vld [vmem:[%s6 + $0x8] sm:$0xff]
    %v309 = vld [vmem:[%s6 + $0x10] sm:$0xff]
    %v310 = vld [vmem:[%s6 + $0x18] sm:$0xff]
    %312 = vrot.lane.b32.xlu0 %v306, 64
    %v313 = vpop.permute.xlu0 %312
    %v314 = vsel %vm226, %v313, 0
    %316 = vmatprep.subr.mxu0 0.0
    %317 = vmatpush1.msra.mxu0 %v307
    %318 = vmatprep.subr.mxu0 0.0
    %319 = vmatpush1.msra.mxu0 %v308
    %320 = vmatprep.subr.mxu0 0.0
    %321 = vmatpush1.msra.mxu0 %v309
    %322 = vmatprep.subr.mxu0 0.0
    %323 = vmatpush1.msra.mxu0 %v310
    %324 = vmatprep.subr.mxu0 0.0
    %325 = vmatpush1.msra.mxu0 0.0
    %326 = vmatprep.subr.mxu0 0.0
    %327 = vmatpush1.msra.mxu0 0.0
    %328 = vmatprep.subr.mxu0 0.0
    %329 = vmatpush1.msra.mxu0 0.0
    %330 = vmatprep.subr.mxu0 0.0
    %331 = vmatpush1.msra.mxu0 0.0
    %332 = vmatprep.subr.mxu0 0.0
    %333 = vmatpush1.msra.mxu0 0.0
    %334 = vmatprep.subr.mxu0 0.0
    %335 = vmatpush1.msra.mxu0 0.0
    %336 = vmatprep.subr.mxu0 0.0
    %337 = vmatpush1.msra.mxu0 0.0
    %338 = vmatprep.subr.mxu0 0.0
    %339 = vmatpush1.msra.mxu0 0.0
    %340 = vmatprep.subr.mxu0 0.0
    %341 = vmatpush1.msra.mxu0 0.0
    %342 = vmatprep.subr.mxu0 0.0
    %343 = vmatpush1.msra.mxu0 0.0
    %344 = vmatprep.subr.mxu0 0.0
    %345 = vmatpush1.msra.mxu0 0.0
    %346 = vmatprep.subr.mxu0 0.0
    %347 = vmatpush1.msra.mxu0 0.0
    %348 = vmatprep.subr.mxu0 0.0
    %349 = vmatpush1.msra.mxu0 0.0
    %350 = vmatprep.subr.mxu0 0.0
    %351 = vmatpush1.msra.mxu0 0.0
    %352 = vmatprep.subr.mxu0 0.0
    %353 = vmatpush1.msra.mxu0 0.0
    %354 = vmatprep.subr.mxu0 0.0
    %355 = vmatpush1.msra.mxu0 0.0
    %356 = vmatprep.subr.mxu0 0.0
    %357 = vmatpush1.msra.mxu0 0.0
    %358 = vmatprep.subr.mxu0 0.0
    %359 = vmatpush1.msra.mxu0 0.0
    %360 = vmatprep.subr.mxu0 0.0
    %361 = vmatpush1.msra.mxu0 0.0
    %362 = vmatprep.subr.mxu0 0.0
    %363 = vmatpush1.msra.mxu0 0.0
    %364 = vmatprep.subr.mxu0 0.0
    %365 = vmatpush1.msra.mxu0 0.0
    %366 = vmatprep.subr.mxu0 0.0
    %367 = vmatpush1.msra.mxu0 0.0
    %368 = vmatprep.subr.mxu0 0.0
    %369 = vmatpush1.msra.mxu0 0.0
    %370 = vmatprep.subr.mxu0 0.0
    %371 = vmatpush1.msra.mxu0 0.0
    %372 = vmatprep.subr.mxu0 0.0
    %373 = vmatpush1.msra.mxu0 0.0
    %374 = vmatprep.subr.mxu0 0.0
    %375 = vmatpush1.msra.mxu0 0.0
    %376 = vmatprep.subr.mxu0 0.0
    %377 = vmatpush1.msra.mxu0 0.0
    %378 = vmatprep.subr.mxu0 0.0
    %379 = vmatpush1.msra.mxu0 0.0
    %380 = vmatprep.mubr.f32.mxu0 0.0
    %381 = vmatmul.mubr.f32.gmra.mrb[0].mxu0 %v314
    %v382 = vpop.f32.mrb[0].mxu0
    %v383 = vadd.f32 0.0, %v382
    %v384 = vpop.f32.mrb[0].mxu0
    %385 = vdwg.mxu0
    %v386 = vmul.f32 %v135, %v383
    %388 = vrot.lane.b32.xlu0 %v135, 96
    %v389 = vpop.permute.xlu0 %388
    %v391 = vadd.f32 %v386, %v389
    %v392 = vmax.f32 %v391, 0.0
    %v393 = vld [vmem:[%s7] sm:$0xff]
    %v394 = vld [vmem:[%s7 + $0x8] sm:$0xff]
    %v395 = vld [vmem:[%s7 + $0x10] sm:$0xff]
    %v396 = vld [vmem:[%s7 + $0x18] sm:$0xff]
    %v398 = vsel %vm226, %v392, 0
    %400 = vmatprep.subr.mxu0 0.0
    %401 = vmatpush1.msra.mxu0 %v393
    %402 = vmatprep.subr.mxu0 0.0
    %403 = vmatpush1.msra.mxu0 %v394
    %404 = vmatprep.subr.mxu0 0.0
    %405 = vmatpush1.msra.mxu0 %v395
    %406 = vmatprep.subr.mxu0 0.0
    %407 = vmatpush1.msra.mxu0 %v396
    %408 = vmatprep.subr.mxu0 0.0
    %409 = vmatpush1.msra.mxu0 0.0
    %410 = vmatprep.subr.mxu0 0.0
    %411 = vmatpush1.msra.mxu0 0.0
    %412 = vmatprep.subr.mxu0 0.0
    %413 = vmatpush1.msra.mxu0 0.0
    %414 = vmatprep.subr.mxu0 0.0
    %415 = vmatpush1.msra.mxu0 0.0
    %416 = vmatprep.subr.mxu0 0.0
    %417 = vmatpush1.msra.mxu0 0.0
    %418 = vmatprep.subr.mxu0 0.0
    %419 = vmatpush1.msra.mxu0 0.0
    %420 = vmatprep.subr.mxu0 0.0
    %421 = vmatpush1.msra.mxu0 0.0
    %422 = vmatprep.subr.mxu0 0.0
    %423 = vmatpush1.msra.mxu0 0.0
    %424 = vmatprep.subr.mxu0 0.0
    %425 = vmatpush1.msra.mxu0 0.0
    %426 = vmatprep.subr.mxu0 0.0
    %427 = vmatpush1.msra.mxu0 0.0
    %428 = vmatprep.subr.mxu0 0.0
    %429 = vmatpush1.msra.mxu0 0.0
    %430 = vmatprep.subr.mxu0 0.0
    %431 = vmatpush1.msra.mxu0 0.0
    %432 = vmatprep.subr.mxu0 0.0
    %433 = vmatpush1.msra.mxu0 0.0
    %434 = vmatprep.subr.mxu0 0.0
    %435 = vmatpush1.msra.mxu0 0.0
    %436 = vmatprep.subr.mxu0 0.0
    %437 = vmatpush1.msra.mxu0 0.0
    %438 = vmatprep.subr.mxu0 0.0
    %439 = vmatpush1.msra.mxu0 0.0
    %440 = vmatprep.subr.mxu0 0.0
    %441 = vmatpush1.msra.mxu0 0.0
    %442 = vmatprep.subr.mxu0 0.0
    %443 = vmatpush1.msra.mxu0 0.0
    %444 = vmatprep.subr.mxu0 0.0
    %445 = vmatpush1.msra.mxu0 0.0
    %446 = vmatprep.subr.mxu0 0.0
    %447 = vmatpush1.msra.mxu0 0.0
    %448 = vmatprep.subr.mxu0 0.0
    %449 = vmatpush1.msra.mxu0 0.0
    %450 = vmatprep.subr.mxu0 0.0
    %451 = vmatpush1.msra.mxu0 0.0
    %452 = vmatprep.subr.mxu0 0.0
    %453 = vmatpush1.msra.mxu0 0.0
    %454 = vmatprep.subr.mxu0 0.0
    %455 = vmatpush1.msra.mxu0 0.0
    %456 = vmatprep.subr.mxu0 0.0
    %457 = vmatpush1.msra.mxu0 0.0
    %458 = vmatprep.subr.mxu0 0.0
    %459 = vmatpush1.msra.mxu0 0.0
    %460 = vmatprep.subr.mxu0 0.0
    %461 = vmatpush1.msra.mxu0 0.0
    %462 = vmatprep.subr.mxu0 0.0
    %463 = vmatpush1.msra.mxu0 0.0
    %464 = vmatprep.mubr.f32.mxu0 0.0
    %465 = vmatmul.mubr.f32.gmra.mrb[0].mxu0 %v398
    %v466 = vpop.f32.mrb[0].mxu0
    %v467 = vadd.f32 0.0, %v466
    %v468 = vpop.f32.mrb[0].mxu0
    %469 = vdwg.mxu0
    %471 = vrot.lane.b32.xlu0 %v467, 64
    %v472 = vpop.permute.xlu0 %471
    %v474 = vmul.f32 %v135, %v472
    %475 = vrot.lane.b32.xlu0 %v135, 124
    %v476 = vpop.permute.xlu0 %475
    %v478 = vadd.f32 %v474, %v476
    %480 = vrot.lane.b32.xlu0 %v478, 64
    %v481 = vpop.permute.xlu0 %480
    %483 = vst.msk [vmem:[%s8] sm:$0xff] %vm57, %v481
    // Predicated region
    $region38: #{tpu_custom_call.1} parent=1 // pred_check
      _
    $region39: #{tpu_custom_call.1} parent=1 // pred_check_branch
      %485 = sbr.rel (0) target = $region41
    $region40: #{tpu_custom_call.1} parent=1 // pred_region
      _
    $region41: #{tpu_custom_call.1} parent=1 // pred_fallthru
      _
    // Predicated region
    $region42: #{tpu_custom_call.1} parent=1 // pred_check
      _
    $region43: #{tpu_custom_call.1} parent=1 // pred_check_branch
      %487 = sbr.rel (0) target = $region45
    $region44: #{tpu_custom_call.1} parent=1 // pred_region
      _
    $region45: #{tpu_custom_call.1} parent=1 // pred_fallthru
      _
    %488 = vsyncpa [#allocation3], 1

</llo_original>
